<compile_context>
chip_gen: v7x
topology: tpu7x:2x2x1
jax: 0.10.0
libtpu: 0.0.40
codegen_flags: <defaults>
</compile_context>

<pallas_src>
from functools import partial

import jax
import jax.numpy as jnp
from jax import lax
from jax.experimental import pallas as pl
from jax.experimental.pallas import tpu as pltpu


def _attention_kernel(x_ref, wqkv_ref, wo_ref, bo_ref, o_ref, *,
                      heads, dim_head, scale):
    inner = heads * dim_head

    x = x_ref[0]                                                     # (N, dim) bf16

    # Fused QKV projection: a single MXU matmul (K = dim, N = 3*inner), f32 result.
    qkv = jnp.dot(x, wqkv_ref[...], preferred_element_type=jnp.float32)  # (N, 3*inner)

    head_outs = []
    for h in range(heads):                                           # static unroll, H small
        lo = h * dim_head
        # Fold the scale into q (N*d elems) instead of scaling the (N,N) score matrix.
        q_h = (qkv[:, lo:lo + dim_head] * scale).astype(jnp.bfloat16)           # (N, d)
        k_h = qkv[:, inner + lo:inner + lo + dim_head].astype(jnp.bfloat16)     # (N, d)
        v_h = qkv[:, 2 * inner + lo:2 * inner + lo + dim_head].astype(jnp.bfloat16)

        # Contract the d axes directly: no explicit k.T (avoids an XLU transpose).
        dots = lax.dot_general(q_h, k_h, (((1,), (1,)), ((), ())),
                               preferred_element_type=jnp.float32)   # (N, N) f32

        # Numerically-stable softmax in f32; reciprocal goes to the EUP slot.
        dots = dots - jnp.max(dots, axis=-1, keepdims=True)
        e = jnp.exp(dots)
        attn = e * pl.reciprocal(jnp.sum(e, axis=-1, keepdims=True), approx=True)

        head_outs.append(
            jnp.dot(attn.astype(jnp.bfloat16), v_h,
                    preferred_element_type=jnp.float32))             # (N, d) f32

    out = jnp.concatenate(head_outs, axis=-1)                        # (N, inner) f32

    # Fused output projection (K = inner) + bias, single store of the output tile.
    proj = jnp.dot(out.astype(jnp.bfloat16), wo_ref[...],
                   preferred_element_type=jnp.float32)               # (N, dim) f32
    o_ref[0] = (proj + bo_ref[...]).astype(o_ref.dtype)


def attention_pallas(x, w_qkv_fused, w_out_fused, bo, *, heads, dim_head, scale):
    """x: (B, N, dim) f32; w_qkv_fused: (dim, 3*inner); w_out_fused: (inner, dim);
    bo: (1, dim) f32."""
    B, N, dim = x.shape
    inner = heads * dim_head

    # bf16 MXU operands (half the DMA bytes, bf16-native MXU on v6e/v7x);
    # softmax / accumulation stay f32 inside the kernel.
    x_bf = x.astype(jnp.bfloat16)
    wqkv_bf = w_qkv_fused.astype(jnp.bfloat16)
    wo_bf = w_out_fused.astype(jnp.bfloat16)

    kernel = partial(_attention_kernel, heads=heads, dim_head=dim_head, scale=scale)
    return pl.pallas_call(
        kernel,
        out_shape=jax.ShapeDtypeStruct((B, N, dim), jnp.float32),
        grid_spec=pltpu.PrefetchScalarGridSpec(
            num_scalar_prefetch=0,
            grid=(B,),                                   # batch only; heads fused in-kernel
            in_specs=[
                pl.BlockSpec((1, N, dim), lambda b: (b, 0, 0)),        # x: per-batch tile
                pl.BlockSpec((dim, 3 * inner), lambda b: (0, 0)),      # Wqkv: VMEM-resident
                pl.BlockSpec((inner, dim), lambda b: (0, 0)),          # Wout: VMEM-resident
                pl.BlockSpec((1, dim), lambda b: (0, 0)),              # bias: VMEM-resident
            ],
            out_specs=pl.BlockSpec((1, N, dim), lambda b: (b, 0, 0)),
        ),
        compiler_params=pltpu.CompilerParams(
            dimension_semantics=("parallel",)),
        # TODO(synk): at real ViT scales (N~197, dim=768) re-derive tiling (pad N to 128,
        # flash-style KV blocking) and set vmem_limit_bytes for v7x's 64 MiB VMEM.
    )(x_bf, wqkv_bf, wo_bf, bo)


def reference_attention(x, w_qkv, w_out, b_out, *, heads, dim_head, scale):
    """Pure-JAX f32 reference matching the PyTorch module semantics."""
    B, N, dim = x.shape
    inner = heads * dim_head
    qkv = x @ w_qkv.T                                       # (B, N, 3*inner)
    q, k, v = jnp.split(qkv, 3, axis=-1)

    def split_heads(t):
        return t.reshape(B, N, heads, dim_head).transpose(0, 2, 1, 3)  # (B, H, N, d)

    q, k, v = split_heads(q), split_heads(k), split_heads(v)
    dots = jnp.einsum("bhnd,bhmd->bhnm", q, k) * scale
    attn = jax.nn.softmax(dots, axis=-1)
    out = jnp.einsum("bhnm,bhmd->bhnd", attn, v)
    out = out.transpose(0, 2, 1, 3).reshape(B, N, inner)
    return out @ w_out.T + b_out


if __name__ == "__main__":
    # Small, deterministic shapes consistent with the module.
    B, N, dim = 2, 8, 32
    heads, dim_head = 4, 16
    inner = heads * dim_head
    scale = dim_head ** (-0.5)

    key = jax.random.PRNGKey(0)
    k_x, k_qkv, k_out, k_b = jax.random.split(key, 4)

    x = jax.random.normal(k_x, (B, N, dim), jnp.float32)
    # PyTorch nn.Linear weight layout is (out_features, in_features).
    w_qkv = jax.random.normal(k_qkv, (3 * inner, dim), jnp.float32) * 0.05
    w_out = jax.random.normal(k_out, (dim, inner), jnp.float32) * 0.05
    b_out = jax.random.normal(k_b, (dim,), jnp.float32) * 0.05

    # Fused weights for the kernel: x @ Wqkv == to_qkv(x); columns ordered
    # [q(head0..H-1), k(...), v(...)] with head-major (h, d) layout, matching the
    # rearrange 'b n (h d) -> b h n d' convention.
    w_qkv_fused = w_qkv.T                 # (dim, 3*inner)
    w_out_fused = w_out.T                 # (inner, dim)
    bo = b_out.reshape(1, dim)

    out = attention_pallas(x, w_qkv_fused, w_out_fused, bo,
                           heads=heads, dim_head=dim_head, scale=scale)
    out = jax.block_until_ready(out)

    ref = reference_attention(x, w_qkv, w_out, b_out,
                              heads=heads, dim_head=dim_head, scale=scale)
    assert out.shape == (B, N, dim)
    # Looser tolerance than the pure-f32 version: MXU operands are bf16 and the
    # softmax denominator uses the approximate EUP reciprocal.
    assert jnp.allclose(out, ref, rtol=2e-2, atol=2e-2), "mismatch vs reference"

    print("KERNEL_OK")
</pallas_src>

<mosaic_0001>
module attributes {stable_mosaic.version = 11 : i64} {
  func.func @_attention_kernel(%arg0: i32, %arg1: memref<1x8x32xbf16, #tpu.memory_space<vmem>>, %arg2: memref<32x192xbf16, #tpu.memory_space<vmem>>, %arg3: memref<64x32xbf16, #tpu.memory_space<vmem>>, %arg4: memref<1x32xf32, #tpu.memory_space<vmem>>, %arg5: memref<1x8x32xf32, #tpu.memory_space<vmem>>) attributes {dimension_semantics = [#tpu.dimension_semantics<parallel>], iteration_bounds = array<i64: 2>, scalar_prefetch = 0 : i64, scratch_operands = 0 : i64, tpu.core_type = #tpu.core_type<tc>, window_params = [{transform_indices = @transform_0, window_bounds = array<i64: 1, 8, 32>}, {pipeline_mode = #tpu.pipeline_mode<synchronous>, transform_indices = @transform_1, window_bounds = array<i64: 32, 192>}, {pipeline_mode = #tpu.pipeline_mode<synchronous>, transform_indices = @transform_2, window_bounds = array<i64: 64, 32>}, {pipeline_mode = #tpu.pipeline_mode<synchronous>, transform_indices = @transform_3, window_bounds = array<i64: 1, 32>}, {transform_indices = @transform_4, window_bounds = array<i64: 1, 8, 32>}]} {
    %c0 = arith.constant 0 : index
    %c0_0 = arith.constant 0 : index
    %c0_1 = arith.constant 0 : index
    %0 = vector.load %arg1[%c0, %c0_0, %c0_1] : memref<1x8x32xbf16, #tpu.memory_space<vmem>>, vector<1x8x32xbf16>
    %1 = vector.shape_cast %0 : vector<1x8x32xbf16> to vector<8x32xbf16>
    %c0_2 = arith.constant 0 : index
    %c0_3 = arith.constant 0 : index
    %2 = vector.load %arg2[%c0_2, %c0_3] : memref<32x192xbf16, #tpu.memory_space<vmem>>, vector<32x192xbf16>
    %cst = arith.constant dense<0.000000e+00> : vector<8x192xf32>
    %3 = tpu.matmul %1, %2, %cst {dimension_numbers = #tpu.dot_dimension_numbers<[1], [0], [0], [1], [0, 0, 1, 1], [], []>} : vector<8x32xbf16>, vector<32x192xbf16>, vector<8x192xf32> -> vector<8x192xf32>
    %4 = vector.extract_strided_slice %3 {offsets = [0, 0], sizes = [8, 16], strides = [1, 1]} : vector<8x192xf32> to vector<8x16xf32>
    %cst_4 = arith.constant 2.500000e-01 : f32
    %5 = vector.broadcast %cst_4 : f32 to vector<8x16xf32>
    %6 = arith.mulf %4, %5 : vector<8x16xf32>
    %7 = arith.truncf %6 : vector<8x16xf32> to vector<8x16xbf16>
    %8 = vector.extract_strided_slice %3 {offsets = [0, 64], sizes = [8, 16], strides = [1, 1]} : vector<8x192xf32> to vector<8x16xf32>
    %9 = arith.truncf %8 : vector<8x16xf32> to vector<8x16xbf16>
    %10 = vector.extract_strided_slice %3 {offsets = [0, 128], sizes = [8, 16], strides = [1, 1]} : vector<8x192xf32> to vector<8x16xf32>
    %11 = arith.truncf %10 : vector<8x16xf32> to vector<8x16xbf16>
    %cst_5 = arith.constant dense<0.000000e+00> : vector<8x8xf32>
    %12 = tpu.matmul %7, %9, %cst_5 {dimension_numbers = #tpu.dot_dimension_numbers<[1], [1], [0], [0], [0, 0, 1, 0], [], []>} : vector<8x16xbf16>, vector<8x16xbf16>, vector<8x8xf32> -> vector<8x8xf32>
    %cst_6 = arith.constant dense<0xFF800000> : vector<8xf32>
    %13 = vector.multi_reduction <maximumf>, %12, %cst_6 [1] : vector<8x8xf32> to vector<8xf32>
    %14 = vector.shape_cast %13 : vector<8xf32> to vector<8x1xf32>
    %15 = vector.broadcast %14 : vector<8x1xf32> to vector<8x8xf32>
    %16 = arith.subf %12, %15 : vector<8x8xf32>
    %17 = math.exp %16 : vector<8x8xf32>
    %cst_7 = arith.constant dense<0.000000e+00> : vector<8xf32>
    %18 = vector.multi_reduction <add>, %17, %cst_7 [1] : vector<8x8xf32> to vector<8xf32>
    %19 = vector.shape_cast %18 : vector<8xf32> to vector<8x1xf32>
    %20 = tpu.reciprocal %19 {approx = true} : vector<8x1xf32> -> vector<8x1xf32>
    %21 = vector.broadcast %20 : vector<8x1xf32> to vector<8x8xf32>
    %22 = arith.mulf %17, %21 : vector<8x8xf32>
    %23 = arith.truncf %22 : vector<8x8xf32> to vector<8x8xbf16>
    %cst_8 = arith.constant dense<0.000000e+00> : vector<8x16xf32>
    %24 = tpu.matmul %23, %11, %cst_8 {dimension_numbers = #tpu.dot_dimension_numbers<[1], [0], [0], [1], [0, 0, 1, 1], [], []>} : vector<8x8xbf16>, vector<8x16xbf16>, vector<8x16xf32> -> vector<8x16xf32>
    %25 = vector.extract_strided_slice %3 {offsets = [0, 16], sizes = [8, 16], strides = [1, 1]} : vector<8x192xf32> to vector<8x16xf32>
    %cst_9 = arith.constant 2.500000e-01 : f32
    %26 = vector.broadcast %cst_9 : f32 to vector<8x16xf32>
    %27 = arith.mulf %25, %26 : vector<8x16xf32>
    %28 = arith.truncf %27 : vector<8x16xf32> to vector<8x16xbf16>
    %29 = vector.extract_strided_slice %3 {offsets = [0, 80], sizes = [8, 16], strides = [1, 1]} : vector<8x192xf32> to vector<8x16xf32>
    %30 = arith.truncf %29 : vector<8x16xf32> to vector<8x16xbf16>
    %31 = vector.extract_strided_slice %3 {offsets = [0, 144], sizes = [8, 16], strides = [1, 1]} : vector<8x192xf32> to vector<8x16xf32>
    %32 = arith.truncf %31 : vector<8x16xf32> to vector<8x16xbf16>
    %cst_10 = arith.constant dense<0.000000e+00> : vector<8x8xf32>
    %33 = tpu.matmul %28, %30, %cst_10 {dimension_numbers = #tpu.dot_dimension_numbers<[1], [1], [0], [0], [0, 0, 1, 0], [], []>} : vector<8x16xbf16>, vector<8x16xbf16>, vector<8x8xf32> -> vector<8x8xf32>
    %cst_11 = arith.constant dense<0xFF800000> : vector<8xf32>
    %34 = vector.multi_reduction <maximumf>, %33, %cst_11 [1] : vector<8x8xf32> to vector<8xf32>
    %35 = vector.shape_cast %34 : vector<8xf32> to vector<8x1xf32>
    %36 = vector.broadcast %35 : vector<8x1xf32> to vector<8x8xf32>
    %37 = arith.subf %33, %36 : vector<8x8xf32>
    %38 = math.exp %37 : vector<8x8xf32>
    %cst_12 = arith.constant dense<0.000000e+00> : vector<8xf32>
    %39 = vector.multi_reduction <add>, %38, %cst_12 [1] : vector<8x8xf32> to vector<8xf32>
    %40 = vector.shape_cast %39 : vector<8xf32> to vector<8x1xf32>
    %41 = tpu.reciprocal %40 {approx = true} : vector<8x1xf32> -> vector<8x1xf32>
    %42 = vector.broadcast %41 : vector<8x1xf32> to vector<8x8xf32>
    %43 = arith.mulf %38, %42 : vector<8x8xf32>
    %44 = arith.truncf %43 : vector<8x8xf32> to vector<8x8xbf16>
    %cst_13 = arith.constant dense<0.000000e+00> : vector<8x16xf32>
    %45 = tpu.matmul %44, %32, %cst_13 {dimension_numbers = #tpu.dot_dimension_numbers<[1], [0], [0], [1], [0, 0, 1, 1], [], []>} : vector<8x8xbf16>, vector<8x16xbf16>, vector<8x16xf32> -> vector<8x16xf32>
    %46 = vector.extract_strided_slice %3 {offsets = [0, 32], sizes = [8, 16], strides = [1, 1]} : vector<8x192xf32> to vector<8x16xf32>
    %cst_14 = arith.constant 2.500000e-01 : f32
    %47 = vector.broadcast %cst_14 : f32 to vector<8x16xf32>
    %48 = arith.mulf %46, %47 : vector<8x16xf32>
    %49 = arith.truncf %48 : vector<8x16xf32> to vector<8x16xbf16>
    %50 = vector.extract_strided_slice %3 {offsets = [0, 96], sizes = [8, 16], strides = [1, 1]} : vector<8x192xf32> to vector<8x16xf32>
    %51 = arith.truncf %50 : vector<8x16xf32> to vector<8x16xbf16>
    %52 = vector.extract_strided_slice %3 {offsets = [0, 160], sizes = [8, 16], strides = [1, 1]} : vector<8x192xf32> to vector<8x16xf32>
    %53 = arith.truncf %52 : vector<8x16xf32> to vector<8x16xbf16>
    %cst_15 = arith.constant dense<0.000000e+00> : vector<8x8xf32>
    %54 = tpu.matmul %49, %51, %cst_15 {dimension_numbers = #tpu.dot_dimension_numbers<[1], [1], [0], [0], [0, 0, 1, 0], [], []>} : vector<8x16xbf16>, vector<8x16xbf16>, vector<8x8xf32> -> vector<8x8xf32>
    %cst_16 = arith.constant dense<0xFF800000> : vector<8xf32>
    %55 = vector.multi_reduction <maximumf>, %54, %cst_16 [1] : vector<8x8xf32> to vector<8xf32>
    %56 = vector.shape_cast %55 : vector<8xf32> to vector<8x1xf32>
    %57 = vector.broadcast %56 : vector<8x1xf32> to vector<8x8xf32>
    %58 = arith.subf %54, %57 : vector<8x8xf32>
    %59 = math.exp %58 : vector<8x8xf32>
    %cst_17 = arith.constant dense<0.000000e+00> : vector<8xf32>
    %60 = vector.multi_reduction <add>, %59, %cst_17 [1] : vector<8x8xf32> to vector<8xf32>
    %61 = vector.shape_cast %60 : vector<8xf32> to vector<8x1xf32>
    %62 = tpu.reciprocal %61 {approx = true} : vector<8x1xf32> -> vector<8x1xf32>
    %63 = vector.broadcast %62 : vector<8x1xf32> to vector<8x8xf32>
    %64 = arith.mulf %59, %63 : vector<8x8xf32>
    %65 = arith.truncf %64 : vector<8x8xf32> to vector<8x8xbf16>
    %cst_18 = arith.constant dense<0.000000e+00> : vector<8x16xf32>
    %66 = tpu.matmul %65, %53, %cst_18 {dimension_numbers = #tpu.dot_dimension_numbers<[1], [0], [0], [1], [0, 0, 1, 1], [], []>} : vector<8x8xbf16>, vector<8x16xbf16>, vector<8x16xf32> -> vector<8x16xf32>
    %67 = vector.extract_strided_slice %3 {offsets = [0, 48], sizes = [8, 16], strides = [1, 1]} : vector<8x192xf32> to vector<8x16xf32>
    %cst_19 = arith.constant 2.500000e-01 : f32
    %68 = vector.broadcast %cst_19 : f32 to vector<8x16xf32>
    %69 = arith.mulf %67, %68 : vector<8x16xf32>
    %70 = arith.truncf %69 : vector<8x16xf32> to vector<8x16xbf16>
    %71 = vector.extract_strided_slice %3 {offsets = [0, 112], sizes = [8, 16], strides = [1, 1]} : vector<8x192xf32> to vector<8x16xf32>
    %72 = arith.truncf %71 : vector<8x16xf32> to vector<8x16xbf16>
    %73 = vector.extract_strided_slice %3 {offsets = [0, 176], sizes = [8, 16], strides = [1, 1]} : vector<8x192xf32> to vector<8x16xf32>
    %74 = arith.truncf %73 : vector<8x16xf32> to vector<8x16xbf16>
    %cst_20 = arith.constant dense<0.000000e+00> : vector<8x8xf32>
    %75 = tpu.matmul %70, %72, %cst_20 {dimension_numbers = #tpu.dot_dimension_numbers<[1], [1], [0], [0], [0, 0, 1, 0], [], []>} : vector<8x16xbf16>, vector<8x16xbf16>, vector<8x8xf32> -> vector<8x8xf32>
    %cst_21 = arith.constant dense<0xFF800000> : vector<8xf32>
    %76 = vector.multi_reduction <maximumf>, %75, %cst_21 [1] : vector<8x8xf32> to vector<8xf32>
    %77 = vector.shape_cast %76 : vector<8xf32> to vector<8x1xf32>
    %78 = vector.broadcast %77 : vector<8x1xf32> to vector<8x8xf32>
    %79 = arith.subf %75, %78 : vector<8x8xf32>
    %80 = math.exp %79 : vector<8x8xf32>
    %cst_22 = arith.constant dense<0.000000e+00> : vector<8xf32>
    %81 = vector.multi_reduction <add>, %80, %cst_22 [1] : vector<8x8xf32> to vector<8xf32>
    %82 = vector.shape_cast %81 : vector<8xf32> to vector<8x1xf32>
    %83 = tpu.reciprocal %82 {approx = true} : vector<8x1xf32> -> vector<8x1xf32>
    %84 = vector.broadcast %83 : vector<8x1xf32> to vector<8x8xf32>
    %85 = arith.mulf %80, %84 : vector<8x8xf32>
    %86 = arith.truncf %85 : vector<8x8xf32> to vector<8x8xbf16>
    %cst_23 = arith.constant dense<0.000000e+00> : vector<8x16xf32>
    %87 = tpu.matmul %86, %74, %cst_23 {dimension_numbers = #tpu.dot_dimension_numbers<[1], [0], [0], [1], [0, 0, 1, 1], [], []>} : vector<8x8xbf16>, vector<8x16xbf16>, vector<8x16xf32> -> vector<8x16xf32>
    %88 = tpu.concatenate %24, %45, %66, %87 in 1 : vector<8x16xf32>, vector<8x16xf32>, vector<8x16xf32>, vector<8x16xf32> -> vector<8x64xf32>
    %89 = arith.truncf %88 : vector<8x64xf32> to vector<8x64xbf16>
    %c0_24 = arith.constant 0 : index
    %c0_25 = arith.constant 0 : index
    %90 = vector.load %arg3[%c0_24, %c0_25] : memref<64x32xbf16, #tpu.memory_space<vmem>>, vector<64x32xbf16>
    %cst_26 = arith.constant dense<0.000000e+00> : vector<8x32xf32>
    %91 = tpu.matmul %89, %90, %cst_26 {dimension_numbers = #tpu.dot_dimension_numbers<[1], [0], [0], [1], [0, 0, 1, 1], [], []>} : vector<8x64xbf16>, vector<64x32xbf16>, vector<8x32xf32> -> vector<8x32xf32>
    %c0_27 = arith.constant 0 : index
    %c0_28 = arith.constant 0 : index
    %92 = vector.load %arg4[%c0_27, %c0_28] : memref<1x32xf32, #tpu.memory_space<vmem>>, vector<1x32xf32>
    %93 = vector.broadcast %92 : vector<1x32xf32> to vector<8x32xf32>
    %94 = arith.addf %91, %93 : vector<8x32xf32>
    %c0_29 = arith.constant 0 : index
    %c0_30 = arith.constant 0 : index
    %c0_31 = arith.constant 0 : index
    %95 = vector.load %arg5[%c0_29, %c0_30, %c0_31] : memref<1x8x32xf32, #tpu.memory_space<vmem>>, vector<1x8x32xf32>
    %96 = vector.shape_cast %95 : vector<1x8x32xf32> to vector<8x32xf32>
    %97 = vector.shape_cast %94 : vector<8x32xf32> to vector<1x8x32xf32>
    tpu.vector_store %arg5[%c0_29, %c0_30, %c0_31], %97 {strides = array<i32>} : memref<1x8x32xf32, #tpu.memory_space<vmem>>, vector<1x8x32xf32>,
    return
  }
  func.func @transform_0(%arg0: i32) -> (i32, i32, i32) {
    %c0_i32 = arith.constant 0 : i32
    %c0_i32_0 = arith.constant 0 : i32
    %c0_i32_1 = arith.constant 0 : i32
    return %arg0, %c0_i32, %c0_i32_0 : i32, i32, i32
  }
  func.func @transform_1(%arg0: i32) -> (i32, i32) {
    %c0_i32 = arith.constant 0 : i32
    %c0_i32_0 = arith.constant 0 : i32
    %c0_i32_1 = arith.constant 0 : i32
    return %c0_i32, %c0_i32_0 : i32, i32
  }
  func.func @transform_2(%arg0: i32) -> (i32, i32) {
    %c0_i32 = arith.constant 0 : i32
    %c0_i32_0 = arith.constant 0 : i32
    %c0_i32_1 = arith.constant 0 : i32
    return %c0_i32, %c0_i32_0 : i32, i32
  }
  func.func @transform_3(%arg0: i32) -> (i32, i32) {
    %c0_i32 = arith.constant 0 : i32
    %c0_i32_0 = arith.constant 0 : i32
    %c0_i32_1 = arith.constant 0 : i32
    return %c0_i32, %c0_i32_0 : i32, i32
  }
  func.func @transform_4(%arg0: i32) -> (i32, i32, i32) {
    %c0_i32 = arith.constant 0 : i32
    %c0_i32_0 = arith.constant 0 : i32
    %c0_i32_1 = arith.constant 0 : i32
    return %arg0, %c0_i32, %c0_i32_0 : i32, i32, i32
  }
}

</mosaic_0001>

<llo_original>
// kernel: tpu_custom_call.1
$region0: #{tpu_custom_call.1}
  #allocation0 [shape = 'u32[]', space=smem, size = 0x4, offset = 0x4, fixed_abs, tag = 'smem constant byte address 0x4 - core index']
  #allocation1 [shape = 'u32[144,128]{1,0:T(1,128)}', space=vmem, size = 0x12000, scoped, tag = 'internal scratch']
  %s0 = inlined_call_operand.vmem [shape: bf16[2,8,32], index: 0, kind: input, shape index: {}]
  %s1 = inlined_call_operand.vmem [shape: bf16[32,192], index: 1, kind: input, shape index: {}]
  %s2 = inlined_call_operand.vmem [shape: bf16[64,32], index: 2, kind: input, shape index: {}]
  %s3 = inlined_call_operand.vmem [shape: f32[1,32], index: 3, kind: input, shape index: {}]
  %s4 = inlined_call_operand.hbm [shape: f32[2,8,32], index: 4, kind: output, shape index: {}]
  %s5 = sld [smem:[#allocation0]]
  $region49: #{tpu_custom_call.1} parent=0
    _
  %s7 = ssub.s32 1, %s5
  %s8 = scalar_select 0, %s7, %s5
  $region1: #{tpu_custom_call.1} parent=0
    #allocation2 [shape = 'u8[8192]{0}', space=vmem, size = 0x2000, scoped, tag = 'output window, operand 0']
    #allocation3 [shape = 's32[2]{0}', space=sflag, size = 0x8, scoped, tag = 'scoped memory for tpu_custom_call.1']
    %9 = vsyncpa [#allocation3], 0
    %s10 = scalar_lea.sflag [#allocation3], 1
    %11 = vsyncpa %s10, 0
    loop: start=0, step=1, limit=4
    $region2: #{tpu_custom_call.1} parent=1 // loop_pre_header
      _
    $region3: #{tpu_custom_call.1} parent=1 // loop_header
      %s13 = sphi 0, %s17
      %p14 = scmp.ge.s32.totalorder %s13, 4
      %s23 = sphi 0, %s25
      %s26 = sphi 0, %s23
      %s27 = sphi 0, %s26
      %s43 = sphi 0, %s27
      %s47 = sphi 0, %s47
      %s49 = sphi 0, %s47
      %s50 = sphi 0, %s49
      %s64 = sphi 0, %s50
      %s68 = sphi 0, %s68
      %s70 = sphi 0, %s68
      %s71 = sphi 0, %s70
      %s85 = sphi 0, %s71
      %s89 = sphi 0, %s89
      %s91 = sphi 0, %s89
      %s92 = sphi 0, %s91
      %s106 = sphi 0, %s92
      %s112 = sphi 0, %s114
      %s115 = sphi 0, %s112
      %s116 = sphi 0, %s115
      %s132 = sphi 0, %s116
    $region4: #{tpu_custom_call.1} parent=1 // loop_header_branch
      %16 = sbr.rel (%p14) target = $region8
    $region5: #{tpu_custom_call.1} parent=1 // loop_body
      %s18 = ssub.s32 %s13, 1
      %s19 = ssub.s32 %s13, 2
      %s20 = sadd.s32 %s13, 1
      %s21 = ssub.s32 %s13, %s20
      %p22 = scmp.eq.s32.totalorder %s21, 0
      %s24 = sadd.s32 %s23, 1
      %s25 = scalar_select %p22, %s23, %s24
      %p28 = pneg %p22
      %p29 = scmp.eq.s32.totalorder %s13, 1
      %p30 = por %p28, %p29
      %p31 = scmp.ne.s32.totalorder %s23, %s26
      %p32 = scmp.eq.s32.totalorder %s13, 0
      %p33 = por %p31, %p32
      %p34 = scmp.ne.s32.totalorder %s23, %s26
      %p35 = scmp.eq.s32.totalorder %s18, 1
      %p36 = por %p34, %p35
      %p37 = scmp.ne.s32.totalorder %s26, %s27
      %p38 = scmp.eq.s32.totalorder %s18, 0
      %p39 = por %p37, %p38
      %p40 = scmp.ne.s32.totalorder %s26, %s27
      %p41 = scmp.eq.s32.totalorder %s19, 1
      %p42 = por %p40, %p41
      %p44 = scmp.ne.s32.totalorder %s27, %s43
      %p45 = scmp.eq.s32.totalorder %s19, 0
      %p46 = por %p44, %p45
      %s48 = sadd.s32 %s47, 1
      %p51 = scmp.eq.s32.totalorder %s13, 1
      %p52 = scmp.ne.s32.totalorder %s47, %s49
      %p53 = scmp.eq.s32.totalorder %s13, 0
      %p54 = por %p52, %p53
      %p55 = scmp.ne.s32.totalorder %s47, %s49
      %p56 = scmp.eq.s32.totalorder %s18, 1
      %p57 = por %p55, %p56
      %p58 = scmp.ne.s32.totalorder %s49, %s50
      %p59 = scmp.eq.s32.totalorder %s18, 0
      %p60 = por %p58, %p59
      %p61 = scmp.ne.s32.totalorder %s49, %s50
      %p62 = scmp.eq.s32.totalorder %s19, 1
      %p63 = por %p61, %p62
      %p65 = scmp.ne.s32.totalorder %s50, %s64
      %p66 = scmp.eq.s32.totalorder %s19, 0
      %p67 = por %p65, %p66
      %s69 = sadd.s32 %s68, 1
      %p72 = scmp.eq.s32.totalorder %s13, 1
      %p73 = scmp.ne.s32.totalorder %s68, %s70
      %p74 = scmp.eq.s32.totalorder %s13, 0
      %p75 = por %p73, %p74
      %p76 = scmp.ne.s32.totalorder %s68, %s70
      %p77 = scmp.eq.s32.totalorder %s18, 1
      %p78 = por %p76, %p77
      %p79 = scmp.ne.s32.totalorder %s70, %s71
      %p80 = scmp.eq.s32.totalorder %s18, 0
      %p81 = por %p79, %p80
      %p82 = scmp.ne.s32.totalorder %s70, %s71
      %p83 = scmp.eq.s32.totalorder %s19, 1
      %p84 = por %p82, %p83
      %p86 = scmp.ne.s32.totalorder %s71, %s85
      %p87 = scmp.eq.s32.totalorder %s19, 0
      %p88 = por %p86, %p87
      %s90 = sadd.s32 %s89, 1
      %p93 = scmp.eq.s32.totalorder %s13, 1
      %p94 = scmp.ne.s32.totalorder %s89, %s91
      %p95 = scmp.eq.s32.totalorder %s13, 0
      %p96 = por %p94, %p95
      %p97 = scmp.ne.s32.totalorder %s89, %s91
      %p98 = scmp.eq.s32.totalorder %s18, 1
      %p99 = por %p97, %p98
      %p100 = scmp.ne.s32.totalorder %s91, %s92
      %p101 = scmp.eq.s32.totalorder %s18, 0
      %p102 = por %p100, %p101
      %p103 = scmp.ne.s32.totalorder %s91, %s92
      %p104 = scmp.eq.s32.totalorder %s19, 1
      %p105 = por %p103, %p104
      %p107 = scmp.ne.s32.totalorder %s92, %s106
      %p108 = scmp.eq.s32.totalorder %s19, 0
      %p109 = por %p107, %p108
      %s110 = ssub.s32 %s13, %s20
      %p111 = scmp.eq.s32.totalorder %s110, 0
      %s113 = sadd.s32 %s112, 1
      %s114 = scalar_select %p111, %s112, %s113
      %p117 = pneg %p111
      %p118 = scmp.eq.s32.totalorder %s13, 1
      %p119 = por %p117, %p118
      %p120 = scmp.ne.s32.totalorder %s112, %s115
      %p121 = scmp.eq.s32.totalorder %s13, 0
      %p122 = por %p120, %p121
      %p123 = scmp.ne.s32.totalorder %s112, %s115
      %p124 = scmp.eq.s32.totalorder %s18, 1
      %p125 = por %p123, %p124
      %p126 = scmp.ne.s32.totalorder %s115, %s116
      %p127 = scmp.eq.s32.totalorder %s18, 0
      %p128 = por %p126, %p127
      %p129 = scmp.ne.s32.totalorder %s115, %s116
      %p130 = scmp.eq.s32.totalorder %s19, 1
      %p131 = por %p129, %p130
      %p133 = scmp.ne.s32.totalorder %s116, %s132
      %p134 = scmp.eq.s32.totalorder %s19, 0
      %p135 = por %p133, %p134
      %p136 = scmp.le.s32.totalorder 1, %s13
      %p137 = scmp.lt.s32.totalorder %s13, 3
      %p138 = pnand %p136, %p137
      %p139 = pneg %p138
      // Predicated region
      $region9: #{tpu_custom_call.1} parent=5 // pred_check
        _
      $region10: #{tpu_custom_call.1} parent=5 // pred_check_branch
        %141 = sbr.rel (%p138) target = $region12
      $region11: #{tpu_custom_call.1} parent=5 // pred_region
        %s142 = ssub.s32 %s13, 1
        // Predicated region
        $region13: #{tpu_custom_call.1} parent=11 // pred_check
          %p143 = pneg %p60
        $region14: #{tpu_custom_call.1} parent=11 // pred_check_branch
          %145 = sbr.rel (%p143) target = $region16
        $region15: #{tpu_custom_call.1} parent=11 // pred_region
          _
        $region16: #{tpu_custom_call.1} parent=11 // pred_fallthru
          _
        // Predicated region
        $region17: #{tpu_custom_call.1} parent=11 // pred_check
          %p146 = pneg %p81
        $region18: #{tpu_custom_call.1} parent=11 // pred_check_branch
          %148 = sbr.rel (%p146) target = $region20
        $region19: #{tpu_custom_call.1} parent=11 // pred_region
          _
        $region20: #{tpu_custom_call.1} parent=11 // pred_fallthru
          _
        // Predicated region
        $region21: #{tpu_custom_call.1} parent=11 // pred_check
          %p149 = pneg %p102
        $region22: #{tpu_custom_call.1} parent=11 // pred_check_branch
          %151 = sbr.rel (%p149) target = $region24
        $region23: #{tpu_custom_call.1} parent=11 // pred_region
          _
        $region24: #{tpu_custom_call.1} parent=11 // pred_fallthru
          _
      $region12: #{tpu_custom_call.1} parent=5 // pred_fallthru
        _
      %p152 = scmp.lt.s32.totalorder %s13, 2
      // Predicated region
      $region25: #{tpu_custom_call.1} parent=5 // pred_check
        %p153 = pneg %p152
      $region26: #{tpu_custom_call.1} parent=5 // pred_check_branch
        %155 = sbr.rel (%p153) target = $region28
      $region27: #{tpu_custom_call.1} parent=5 // pred_region
        // Predicated region
        $region29: #{tpu_custom_call.1} parent=27 // pred_check
          %p156 = pneg %p33
        $region30: #{tpu_custom_call.1} parent=27 // pred_check_branch
          %158 = sbr.rel (%p156) target = $region32
        $region31: #{tpu_custom_call.1} parent=27 // pred_region
          %p159 = scmp.lt.s32.totalorder %s13, 1
          %s160 = scalar_select %p159, %s13, 1
          %s161 = smul.addr %s160, 4
          %s162 = scalar_lea.vmem %s0, %s161
        $region32: #{tpu_custom_call.1} parent=27 // pred_fallthru
          _
      $region28: #{tpu_custom_call.1} parent=5 // pred_fallthru
        _
      %p163 = scmp.le.s32.totalorder 1, %s13
      %p164 = scmp.lt.s32.totalorder %s13, 3
      %p165 = pnand %p163, %p164
      %p166 = pneg %p165
      // Predicated region
      $region33: #{tpu_custom_call.1} parent=5 // pred_check
        _
      $region34: #{tpu_custom_call.1} parent=5 // pred_check_branch
        %168 = sbr.rel (%p165) target = $region36
      $region35: #{tpu_custom_call.1} parent=5 // pred_region
        %s169 = ssub.s32 %s13, 1
        %p170 = scmp.lt.s32.totalorder %s18, 1
        %s171 = scalar_select %p170, %s18, 1
        %s172 = smul.addr %s171, 4
        %s173 = scalar_lea.vmem %s0, %s172
        %p174 = pneg %p39
        %p175 = pneg %p36
        %p176 = pneg %p60
        %p177 = pneg %p57
        %p178 = pneg %p81
        %p179 = pneg %p78
        %p180 = pneg %p102
        %p181 = pneg %p99
        %p182 = pneg %p128
        %p183 = pneg %p125
        %s184 = sand.u32 %s115, 1
        %s185 = scalar_lea.sflag [#allocation3], %s184
        %s186 = sand.u32 %s115, 1
        %s187 = smul.addr %s186, 8
        %s188 = scalar_lea.vmem [#allocation2], %s187
        %p189 = scmp.lt.s32.totalorder %s18, 1
        %s190 = scalar_select %p189, %s18, 1
        %s191 = smul.addr %s190, 4
        %s192 = scalar_lea.vmem %s0, %s191
        %v194 = vld [vmem:[%s192] sm:$0xf]
        %v195 = vld [vmem:[%s1] sm:$0xff]
        %v196 = vld [vmem:[%s1 + $0x8] sm:$0xff]
        %v197 = vld [vmem:[%s1 + $0x10] sm:$0xff]
        %v198 = vld [vmem:[%s1 + $0x18] sm:$0xff]
        %v203 = vunpack.c.l.b16 %v195
        %v204 = vunpack.c.h.b16 %v195
        %v205 = vunpack.c.l.b16 %v196
        %v206 = vunpack.c.h.b16 %v196
        %v207 = vunpack.c.l.b16 %v197
        %v208 = vunpack.c.h.b16 %v197
        %v209 = vunpack.c.l.b16 %v198
        %v210 = vunpack.c.h.b16 %v198
        %v211 = vpack.c.b16 %v205, %v203
        %v212 = vpack.c.b16 %v206, %v204
        %v213 = vpack.c.b16 %v209, %v207
        %v214 = vpack.c.b16 %v210, %v208
        %vm219 = vcmask 261120
        %v221 = vsel %vm219, %v194, 0
        %223 = vmatprep.subr.bf16.mxu0 %v212
        %224 = vmatpush1.bf16.msra.mxu0 %v211
        %225 = vmatprep.subr.bf16.mxu0 %v214
        %226 = vmatpush1.bf16.msra.mxu0 %v213
        %227 = vmatprep.subr.bf16.mxu0 0
        %228 = vmatpush1.bf16.msra.mxu0 0
        %229 = vmatprep.subr.bf16.mxu0 0
        %230 = vmatpush1.bf16.msra.mxu0 0
        %231 = vmatprep.subr.bf16.mxu0 0
        %232 = vmatpush1.bf16.msra.mxu0 0
        %233 = vmatprep.subr.bf16.mxu0 0
        %234 = vmatpush1.bf16.msra.mxu0 0
        %235 = vmatprep.subr.bf16.mxu0 0
        %236 = vmatpush1.bf16.msra.mxu0 0
        %237 = vmatprep.subr.bf16.mxu0 0
        %238 = vmatpush1.bf16.msra.mxu0 0
        %239 = vmatprep.subr.bf16.mxu0 0
        %240 = vmatpush1.bf16.msra.mxu0 0
        %241 = vmatprep.subr.bf16.mxu0 0
        %242 = vmatpush1.bf16.msra.mxu0 0
        %243 = vmatprep.subr.bf16.mxu0 0
        %244 = vmatpush1.bf16.msra.mxu0 0
        %245 = vmatprep.subr.bf16.mxu0 0
        %246 = vmatpush1.bf16.msra.mxu0 0
        %247 = vmatprep.subr.bf16.mxu0 0
        %248 = vmatpush1.bf16.msra.mxu0 0
        %249 = vmatprep.subr.bf16.mxu0 0
        %250 = vmatpush1.bf16.msra.mxu0 0
        %251 = vmatprep.subr.bf16.mxu0 0
        %252 = vmatpush1.bf16.msra.mxu0 0
        %253 = vmatprep.subr.bf16.mxu0 0
        %254 = vmatpush1.bf16.msra.mxu0 0
        %255 = vmatprep.mubr.bf16.mxu0 0
        %256 = vmatmul.mubr.bf16.gmra.mrb[0].mxu0 %v221
        %v257 = vpop.f32.mrb[0].mxu0
        %v258 = vadd.f32 0.0, %v257
        %v259 = vpop.f32.mrb[0].mxu0
        %v260 = vadd.f32 0.0, %v259
        %v261 = vpop.f32.mrb[0].mxu0
        %v262 = vpop.f32.mrb[0].mxu0
        %263 = vdwg.mxu0
        %v264 = vmul.f32 %v258, 0.25
        %v265 = vpack.c.bf16 %v264, %v264
        %v266 = vpack.c.bf16 %v258, %v258
        %v267 = vpack.c.bf16 %v260, %v260
        %269 = vrot.lane.b32.xlu0 %v266, 64
        %v270 = vpop.permute.xlu0 %269
        %vm271 = vcmask 130048
        %v273 = vsel %vm271, %v265, 0
        %v276 = vsel %vm271, %v270, 0
        %278 = vmatprep.subr.bf16.mxu0 0
        %279 = vmatpush1.bf16.xpose.msra.mxu0 %v276
        %280 = vmatprep.subr.bf16.mxu0 0
        %281 = vmatpush1.bf16.xpose.msra.mxu0 0
        %282 = vmatprep.subr.bf16.mxu0 0
        %283 = vmatpush1.bf16.xpose.msra.mxu0 0
        %284 = vmatprep.subr.bf16.mxu0 0
        %285 = vmatpush1.bf16.xpose.msra.mxu0 0
        %286 = vmatprep.subr.bf16.mxu0 0
        %287 = vmatpush1.bf16.xpose.msra.mxu0 0
        %288 = vmatprep.subr.bf16.mxu0 0
        %289 = vmatpush1.bf16.xpose.msra.mxu0 0
        %290 = vmatprep.subr.bf16.mxu0 0
        %291 = vmatpush1.bf16.xpose.msra.mxu0 0
        %292 = vmatprep.subr.bf16.mxu0 0
        %293 = vmatpush1.bf16.xpose.msra.mxu0 0
        %294 = vmatprep.subr.bf16.mxu0 0
        %295 = vmatpush1.bf16.xpose.msra.mxu0 0
        %296 = vmatprep.subr.bf16.mxu0 0
        %297 = vmatpush1.bf16.xpose.msra.mxu0 0
        %298 = vmatprep.subr.bf16.mxu0 0
        %299 = vmatpush1.bf16.xpose.msra.mxu0 0
        %300 = vmatprep.subr.bf16.mxu0 0
        %301 = vmatpush1.bf16.xpose.msra.mxu0 0
        %302 = vmatprep.subr.bf16.mxu0 0
        %303 = vmatpush1.bf16.xpose.msra.mxu0 0
        %304 = vmatprep.subr.bf16.mxu0 0
        %305 = vmatpush1.bf16.xpose.msra.mxu0 0
        %306 = vmatprep.subr.bf16.mxu0 0
        %307 = vmatpush1.bf16.xpose.msra.mxu0 0
        %308 = vmatprep.subr.bf16.mxu0 0
        %309 = vmatpush1.bf16.xpose.msra.mxu0 0
        %310 = vmatprep.mubr.bf16.mxu0 0
        %311 = vmatmul.mubr.bf16.gmra.mrb[0].mxu0 %v273
        %v312 = vpop.f32.mrb[0].mxu0
        %v313 = vadd.f32 0.0, %v312
        %v314 = vpop.f32.mrb[0].mxu0
        %v315 = vpop.f32.mrb[0].mxu0
        %v316 = vpop.f32.mrb[0].mxu0
        %317 = vdwg.mxu0
        %vm318 = vcmask 64512
        %v319 = vsel %vm318, %v313, -inf
        %320 = vmax.xlane.f32.xlu0 %v319
        %v321 = vpop.xlane.xlu0 %320
        %v322 = vsub.f32 %v313, %v321
        %v323 = vmul.f32 %v322, 1.442695
        %v324 = vpow.pop %v323
        %v325 = vsel %vm318, %v324, 0.0
        %326 = vadd.xlane.f32.xlu0 %v325
        %v327 = vpop.xlane.xlu0 %326
        %v328 = vrcp.pop %v327
        %v329 = vmul.f32 %v324, %v328
        %v330 = vpack.c.bf16 %v329, %v329
        %v332 = vsel %vm318, %v330, 0
        %vm334 = vcmask 1043456
        %v336 = vsel %vm334, %v267, 0
        %338 = vmatprep.subr.bf16.mxu0 0
        %339 = vmatpush1.bf16.msra.mxu0 %v336
        %340 = vmatprep.subr.bf16.mxu0 0
        %341 = vmatpush1.bf16.msra.mxu0 0
        %342 = vmatprep.subr.bf16.mxu0 0
        %343 = vmatpush1.bf16.msra.mxu0 0
        %344 = vmatprep.subr.bf16.mxu0 0
        %345 = vmatpush1.bf16.msra.mxu0 0
        %346 = vmatprep.subr.bf16.mxu0 0
        %347 = vmatpush1.bf16.msra.mxu0 0
        %348 = vmatprep.subr.bf16.mxu0 0
        %349 = vmatpush1.bf16.msra.mxu0 0
        %350 = vmatprep.subr.bf16.mxu0 0
        %351 = vmatpush1.bf16.msra.mxu0 0
        %352 = vmatprep.subr.bf16.mxu0 0
        %353 = vmatpush1.bf16.msra.mxu0 0
        %354 = vmatprep.subr.bf16.mxu0 0
        %355 = vmatpush1.bf16.msra.mxu0 0
        %356 = vmatprep.subr.bf16.mxu0 0
        %357 = vmatpush1.bf16.msra.mxu0 0
        %358 = vmatprep.subr.bf16.mxu0 0
        %359 = vmatpush1.bf16.msra.mxu0 0
        %360 = vmatprep.subr.bf16.mxu0 0
        %361 = vmatpush1.bf16.msra.mxu0 0
        %362 = vmatprep.subr.bf16.mxu0 0
        %363 = vmatpush1.bf16.msra.mxu0 0
        %364 = vmatprep.subr.bf16.mxu0 0
        %365 = vmatpush1.bf16.msra.mxu0 0
        %366 = vmatprep.subr.bf16.mxu0 0
        %367 = vmatpush1.bf16.msra.mxu0 0
        %368 = vmatprep.subr.bf16.mxu0 0
        %369 = vmatpush1.bf16.msra.mxu0 0
        %370 = vmatprep.mubr.bf16.mxu0 0
        %371 = vmatmul.mubr.bf16.gmra.mrb[0].mxu0 %v332
        %v372 = vpop.f32.mrb[0].mxu0
        %v373 = vadd.f32 0.0, %v372
        %v374 = vpop.f32.mrb[0].mxu0
        %v375 = vpop.f32.mrb[0].mxu0
        %v376 = vpop.f32.mrb[0].mxu0
        %377 = vdwg.mxu0
        %379 = vrot.lane.b32.xlu0 %v265, 112
        %v380 = vpop.permute.xlu0 %379
        %381 = vrot.lane.b32.xlu0 %v266, 48
        %v382 = vpop.permute.xlu0 %381
        %v384 = vsel %vm271, %v380, 0
        %v387 = vsel %vm271, %v382, 0
        %389 = vmatprep.subr.bf16.mxu0 0
        %390 = vmatpush1.bf16.xpose.msra.mxu0 %v387
        %391 = vmatprep.subr.bf16.mxu0 0
        %392 = vmatpush1.bf16.xpose.msra.mxu0 0
        %393 = vmatprep.subr.bf16.mxu0 0
        %394 = vmatpush1.bf16.xpose.msra.mxu0 0
        %395 = vmatprep.subr.bf16.mxu0 0
        %396 = vmatpush1.bf16.xpose.msra.mxu0 0
        %397 = vmatprep.subr.bf16.mxu0 0
        %398 = vmatpush1.bf16.xpose.msra.mxu0 0
        %399 = vmatprep.subr.bf16.mxu0 0
        %400 = vmatpush1.bf16.xpose.msra.mxu0 0
        %401 = vmatprep.subr.bf16.mxu0 0
        %402 = vmatpush1.bf16.xpose.msra.mxu0 0
        %403 = vmatprep.subr.bf16.mxu0 0
        %404 = vmatpush1.bf16.xpose.msra.mxu0 0
        %405 = vmatprep.subr.bf16.mxu0 0
        %406 = vmatpush1.bf16.xpose.msra.mxu0 0
        %407 = vmatprep.subr.bf16.mxu0 0
        %408 = vmatpush1.bf16.xpose.msra.mxu0 0
        %409 = vmatprep.subr.bf16.mxu0 0
        %410 = vmatpush1.bf16.xpose.msra.mxu0 0
        %411 = vmatprep.subr.bf16.mxu0 0
        %412 = vmatpush1.bf16.xpose.msra.mxu0 0
        %413 = vmatprep.subr.bf16.mxu0 0
        %414 = vmatpush1.bf16.xpose.msra.mxu0 0
        %415 = vmatprep.subr.bf16.mxu0 0
        %416 = vmatpush1.bf16.xpose.msra.mxu0 0
        %417 = vmatprep.subr.bf16.mxu0 0
        %418 = vmatpush1.bf16.xpose.msra.mxu0 0
        %419 = vmatprep.subr.bf16.mxu0 0
        %420 = vmatpush1.bf16.xpose.msra.mxu0 0
        %421 = vmatprep.mubr.bf16.mxu0 0
        %422 = vmatmul.mubr.bf16.gmra.mrb[0].mxu0 %v384
        %v423 = vpop.f32.mrb[0].mxu0
        %v424 = vadd.f32 0.0, %v423
        %v425 = vpop.f32.mrb[0].mxu0
        %v426 = vpop.f32.mrb[0].mxu0
        %v427 = vpop.f32.mrb[0].mxu0
        %428 = vdwg.mxu0
        %v429 = vsel %vm318, %v424, -inf
        %430 = vmax.xlane.f32.xlu0 %v429
        %v431 = vpop.xlane.xlu0 %430
        %v432 = vsub.f32 %v424, %v431
        %v433 = vmul.f32 %v432, 1.442695
        %v434 = vpow.pop %v433
        %v435 = vsel %vm318, %v434, 0.0
        %436 = vadd.xlane.f32.xlu0 %v435
        %v437 = vpop.xlane.xlu0 %436
        %v438 = vrcp.pop %v437
        %v439 = vmul.f32 %v434, %v438
        %v440 = vpack.c.bf16 %v439, %v439
        %442 = vrot.lane.b32.xlu0 %v267, 112
        %v443 = vpop.permute.xlu0 %442
        %v445 = vsel %vm318, %v440, 0
        %v448 = vsel %vm334, %v443, 0
        %450 = vmatprep.subr.bf16.mxu0 0
        %451 = vmatpush1.bf16.msra.mxu0 %v448
        %452 = vmatprep.subr.bf16.mxu0 0
        %453 = vmatpush1.bf16.msra.mxu0 0
        %454 = vmatprep.subr.bf16.mxu0 0
        %455 = vmatpush1.bf16.msra.mxu0 0
        %456 = vmatprep.subr.bf16.mxu0 0
        %457 = vmatpush1.bf16.msra.mxu0 0
        %458 = vmatprep.subr.bf16.mxu0 0
        %459 = vmatpush1.bf16.msra.mxu0 0
        %460 = vmatprep.subr.bf16.mxu0 0
        %461 = vmatpush1.bf16.msra.mxu0 0
        %462 = vmatprep.subr.bf16.mxu0 0
        %463 = vmatpush1.bf16.msra.mxu0 0
        %464 = vmatprep.subr.bf16.mxu0 0
        %465 = vmatpush1.bf16.msra.mxu0 0
        %466 = vmatprep.subr.bf16.mxu0 0
        %467 = vmatpush1.bf16.msra.mxu0 0
        %468 = vmatprep.subr.bf16.mxu0 0
        %469 = vmatpush1.bf16.msra.mxu0 0
        %470 = vmatprep.subr.bf16.mxu0 0
        %471 = vmatpush1.bf16.msra.mxu0 0
        %472 = vmatprep.subr.bf16.mxu0 0
        %473 = vmatpush1.bf16.msra.mxu0 0
        %474 = vmatprep.subr.bf16.mxu0 0
        %475 = vmatpush1.bf16.msra.mxu0 0
        %476 = vmatprep.subr.bf16.mxu0 0
        %477 = vmatpush1.bf16.msra.mxu0 0
        %478 = vmatprep.subr.bf16.mxu0 0
        %479 = vmatpush1.bf16.msra.mxu0 0
        %480 = vmatprep.subr.bf16.mxu0 0
        %481 = vmatpush1.bf16.msra.mxu0 0
        %482 = vmatprep.mubr.bf16.mxu0 0
        %483 = vmatmul.mubr.bf16.gmra.mrb[0].mxu0 %v445
        %v484 = vpop.f32.mrb[0].mxu0
        %v485 = vadd.f32 0.0, %v484
        %v486 = vpop.f32.mrb[0].mxu0
        %v487 = vpop.f32.mrb[0].mxu0
        %v488 = vpop.f32.mrb[0].mxu0
        %489 = vdwg.mxu0
        %490 = vrot.lane.b32.xlu0 %v265, 96
        %v491 = vpop.permute.xlu0 %490
        %492 = vrot.lane.b32.xlu0 %v266, 32
        %v493 = vpop.permute.xlu0 %492
        %v495 = vsel %vm271, %v491, 0
        %v498 = vsel %vm271, %v493, 0
        %500 = vmatprep.subr.bf16.mxu0 0
        %501 = vmatpush1.bf16.xpose.msra.mxu0 %v498
        %502 = vmatprep.subr.bf16.mxu0 0
        %503 = vmatpush1.bf16.xpose.msra.mxu0 0
        %504 = vmatprep.subr.bf16.mxu0 0
        %505 = vmatpush1.bf16.xpose.msra.mxu0 0
        %506 = vmatprep.subr.bf16.mxu0 0
        %507 = vmatpush1.bf16.xpose.msra.mxu0 0
        %508 = vmatprep.subr.bf16.mxu0 0
        %509 = vmatpush1.bf16.xpose.msra.mxu0 0
        %510 = vmatprep.subr.bf16.mxu0 0
        %511 = vmatpush1.bf16.xpose.msra.mxu0 0
        %512 = vmatprep.subr.bf16.mxu0 0
        %513 = vmatpush1.bf16.xpose.msra.mxu0 0
        %514 = vmatprep.subr.bf16.mxu0 0
        %515 = vmatpush1.bf16.xpose.msra.mxu0 0
        %516 = vmatprep.subr.bf16.mxu0 0
        %517 = vmatpush1.bf16.xpose.msra.mxu0 0
        %518 = vmatprep.subr.bf16.mxu0 0
        %519 = vmatpush1.bf16.xpose.msra.mxu0 0
        %520 = vmatprep.subr.bf16.mxu0 0
        %521 = vmatpush1.bf16.xpose.msra.mxu0 0
        %522 = vmatprep.subr.bf16.mxu0 0
        %523 = vmatpush1.bf16.xpose.msra.mxu0 0
        %524 = vmatprep.subr.bf16.mxu0 0
        %525 = vmatpush1.bf16.xpose.msra.mxu0 0
        %526 = vmatprep.subr.bf16.mxu0 0
        %527 = vmatpush1.bf16.xpose.msra.mxu0 0
        %528 = vmatprep.subr.bf16.mxu0 0
        %529 = vmatpush1.bf16.xpose.msra.mxu0 0
        %530 = vmatprep.subr.bf16.mxu0 0
        %531 = vmatpush1.bf16.xpose.msra.mxu0 0
        %532 = vmatprep.mubr.bf16.mxu0 0
        %533 = vmatmul.mubr.bf16.gmra.mrb[0].mxu0 %v495
        %v534 = vpop.f32.mrb[0].mxu0
        %v535 = vadd.f32 0.0, %v534
        %v536 = vpop.f32.mrb[0].mxu0
        %v537 = vpop.f32.mrb[0].mxu0
        %v538 = vpop.f32.mrb[0].mxu0
        %539 = vdwg.mxu0
        %v540 = vsel %vm318, %v535, -inf
        %541 = vmax.xlane.f32.xlu0 %v540
        %v542 = vpop.xlane.xlu0 %541
        %v543 = vsub.f32 %v535, %v542
        %v544 = vmul.f32 %v543, 1.442695
        %v545 = vpow.pop %v544
        %v546 = vsel %vm318, %v545, 0.0
        %547 = vadd.xlane.f32.xlu0 %v546
        %v548 = vpop.xlane.xlu0 %547
        %v549 = vrcp.pop %v548
        %v550 = vmul.f32 %v545, %v549
        %v551 = vpack.c.bf16 %v550, %v550
        %552 = vrot.lane.b32.xlu0 %v267, 96
        %v553 = vpop.permute.xlu0 %552
        %v555 = vsel %vm318, %v551, 0
        %v558 = vsel %vm334, %v553, 0
        %560 = vmatprep.subr.bf16.mxu0 0
        %561 = vmatpush1.bf16.msra.mxu0 %v558
        %562 = vmatprep.subr.bf16.mxu0 0
        %563 = vmatpush1.bf16.msra.mxu0 0
        %564 = vmatprep.subr.bf16.mxu0 0
        %565 = vmatpush1.bf16.msra.mxu0 0
        %566 = vmatprep.subr.bf16.mxu0 0
        %567 = vmatpush1.bf16.msra.mxu0 0
        %568 = vmatprep.subr.bf16.mxu0 0
        %569 = vmatpush1.bf16.msra.mxu0 0
        %570 = vmatprep.subr.bf16.mxu0 0
        %571 = vmatpush1.bf16.msra.mxu0 0
        %572 = vmatprep.subr.bf16.mxu0 0
        %573 = vmatpush1.bf16.msra.mxu0 0
        %574 = vmatprep.subr.bf16.mxu0 0
        %575 = vmatpush1.bf16.msra.mxu0 0
        %576 = vmatprep.subr.bf16.mxu0 0
        %577 = vmatpush1.bf16.msra.mxu0 0
        %578 = vmatprep.subr.bf16.mxu0 0
        %579 = vmatpush1.bf16.msra.mxu0 0
        %580 = vmatprep.subr.bf16.mxu0 0
        %581 = vmatpush1.bf16.msra.mxu0 0
        %582 = vmatprep.subr.bf16.mxu0 0
        %583 = vmatpush1.bf16.msra.mxu0 0
        %584 = vmatprep.subr.bf16.mxu0 0
        %585 = vmatpush1.bf16.msra.mxu0 0
        %586 = vmatprep.subr.bf16.mxu0 0
        %587 = vmatpush1.bf16.msra.mxu0 0
        %588 = vmatprep.subr.bf16.mxu0 0
        %589 = vmatpush1.bf16.msra.mxu0 0
        %590 = vmatprep.subr.bf16.mxu0 0
        %591 = vmatpush1.bf16.msra.mxu0 0
        %592 = vmatprep.mubr.bf16.mxu0 0
        %593 = vmatmul.mubr.bf16.gmra.mrb[0].mxu0 %v555
        %v594 = vpop.f32.mrb[0].mxu0
        %v595 = vadd.f32 0.0, %v594
        %v596 = vpop.f32.mrb[0].mxu0
        %v597 = vpop.f32.mrb[0].mxu0
        %v598 = vpop.f32.mrb[0].mxu0
        %599 = vdwg.mxu0
        %600 = vrot.lane.b32.xlu0 %v265, 80
        %v601 = vpop.permute.xlu0 %600
        %602 = vrot.lane.b32.xlu0 %v266, 16
        %v603 = vpop.permute.xlu0 %602
        %v605 = vsel %vm271, %v601, 0
        %v608 = vsel %vm271, %v603, 0
        %610 = vmatprep.subr.bf16.mxu0 0
        %611 = vmatpush1.bf16.xpose.msra.mxu0 %v608
        %612 = vmatprep.subr.bf16.mxu0 0
        %613 = vmatpush1.bf16.xpose.msra.mxu0 0
        %614 = vmatprep.subr.bf16.mxu0 0
        %615 = vmatpush1.bf16.xpose.msra.mxu0 0
        %616 = vmatprep.subr.bf16.mxu0 0
        %617 = vmatpush1.bf16.xpose.msra.mxu0 0
        %618 = vmatprep.subr.bf16.mxu0 0
        %619 = vmatpush1.bf16.xpose.msra.mxu0 0
        %620 = vmatprep.subr.bf16.mxu0 0
        %621 = vmatpush1.bf16.xpose.msra.mxu0 0
        %622 = vmatprep.subr.bf16.mxu0 0
        %623 = vmatpush1.bf16.xpose.msra.mxu0 0
        %624 = vmatprep.subr.bf16.mxu0 0
        %625 = vmatpush1.bf16.xpose.msra.mxu0 0
        %626 = vmatprep.subr.bf16.mxu0 0
        %627 = vmatpush1.bf16.xpose.msra.mxu0 0
        %628 = vmatprep.subr.bf16.mxu0 0
        %629 = vmatpush1.bf16.xpose.msra.mxu0 0
        %630 = vmatprep.subr.bf16.mxu0 0
        %631 = vmatpush1.bf16.xpose.msra.mxu0 0
        %632 = vmatprep.subr.bf16.mxu0 0
        %633 = vmatpush1.bf16.xpose.msra.mxu0 0
        %634 = vmatprep.subr.bf16.mxu0 0
        %635 = vmatpush1.bf16.xpose.msra.mxu0 0
        %636 = vmatprep.subr.bf16.mxu0 0
        %637 = vmatpush1.bf16.xpose.msra.mxu0 0
        %638 = vmatprep.subr.bf16.mxu0 0
        %639 = vmatpush1.bf16.xpose.msra.mxu0 0
        %640 = vmatprep.subr.bf16.mxu0 0
        %641 = vmatpush1.bf16.xpose.msra.mxu0 0
        %642 = vmatprep.mubr.bf16.mxu0 0
        %643 = vmatmul.mubr.bf16.gmra.mrb[0].mxu0 %v605
        %v644 = vpop.f32.mrb[0].mxu0
        %v645 = vadd.f32 0.0, %v644
        %v646 = vpop.f32.mrb[0].mxu0
        %v647 = vpop.f32.mrb[0].mxu0
        %v648 = vpop.f32.mrb[0].mxu0
        %649 = vdwg.mxu0
        %v650 = vsel %vm318, %v645, -inf
        %651 = vmax.xlane.f32.xlu0 %v650
        %v652 = vpop.xlane.xlu0 %651
        %v653 = vsub.f32 %v645, %v652
        %v654 = vmul.f32 %v653, 1.442695
        %v655 = vpow.pop %v654
        %v656 = vsel %vm318, %v655, 0.0
        %657 = vadd.xlane.f32.xlu0 %v656
        %v658 = vpop.xlane.xlu0 %657
        %v659 = vrcp.pop %v658
        %v660 = vmul.f32 %v655, %v659
        %v661 = vpack.c.bf16 %v660, %v660
        %662 = vrot.lane.b32.xlu0 %v267, 80
        %v663 = vpop.permute.xlu0 %662
        %v665 = vsel %vm318, %v661, 0
        %v668 = vsel %vm334, %v663, 0
        %670 = vmatprep.subr.bf16.mxu0 0
        %671 = vmatpush1.bf16.msra.mxu0 %v668
        %672 = vmatprep.subr.bf16.mxu0 0
        %673 = vmatpush1.bf16.msra.mxu0 0
        %674 = vmatprep.subr.bf16.mxu0 0
        %675 = vmatpush1.bf16.msra.mxu0 0
        %676 = vmatprep.subr.bf16.mxu0 0
        %677 = vmatpush1.bf16.msra.mxu0 0
        %678 = vmatprep.subr.bf16.mxu0 0
        %679 = vmatpush1.bf16.msra.mxu0 0
        %680 = vmatprep.subr.bf16.mxu0 0
        %681 = vmatpush1.bf16.msra.mxu0 0
        %682 = vmatprep.subr.bf16.mxu0 0
        %683 = vmatpush1.bf16.msra.mxu0 0
        %684 = vmatprep.subr.bf16.mxu0 0
        %685 = vmatpush1.bf16.msra.mxu0 0
        %686 = vmatprep.subr.bf16.mxu0 0
        %687 = vmatpush1.bf16.msra.mxu0 0
        %688 = vmatprep.subr.bf16.mxu0 0
        %689 = vmatpush1.bf16.msra.mxu0 0
        %690 = vmatprep.subr.bf16.mxu0 0
        %691 = vmatpush1.bf16.msra.mxu0 0
        %692 = vmatprep.subr.bf16.mxu0 0
        %693 = vmatpush1.bf16.msra.mxu0 0
        %694 = vmatprep.subr.bf16.mxu0 0
        %695 = vmatpush1.bf16.msra.mxu0 0
        %696 = vmatprep.subr.bf16.mxu0 0
        %697 = vmatpush1.bf16.msra.mxu0 0
        %698 = vmatprep.subr.bf16.mxu0 0
        %699 = vmatpush1.bf16.msra.mxu0 0
        %700 = vmatprep.subr.bf16.mxu0 0
        %701 = vmatpush1.bf16.msra.mxu0 0
        %702 = vmatprep.mubr.bf16.mxu0 0
        %703 = vmatmul.mubr.bf16.gmra.mrb[0].mxu0 %v665
        %v704 = vpop.f32.mrb[0].mxu0
        %v705 = vadd.f32 0.0, %v704
        %v706 = vpop.f32.mrb[0].mxu0
        %v707 = vpop.f32.mrb[0].mxu0
        %v708 = vpop.f32.mrb[0].mxu0
        %709 = vdwg.mxu0
        %711 = vrot.lane.b32.xlu0 %v485, 16
        %v712 = vpop.permute.xlu0 %711
        %715 = vrot.lane.b32.xlu0 %v595, 32
        %v716 = vpop.permute.xlu0 %715
        %719 = vrot.lane.b32.xlu0 %v705, 48
        %v720 = vpop.permute.xlu0 %719
        %v722 = vsel %vm271, %v373, %v712
        %v723 = vsel %vm219, %v722, %v716
        %vm724 = vcmask 392192
        %v725 = vsel %vm724, %v723, %v720
        %v726 = vpack.c.bf16 %v725, %v725
        %v727 = vld [vmem:[%s2] sm:$0xf]
        %v728 = vld [vmem:[%s2 + $0x4] sm:$0xf]
        %v729 = vld [vmem:[%s2 + $0x8] sm:$0xf]
        %v730 = vld [vmem:[%s2 + $0xc] sm:$0xf]
        %v731 = vld [vmem:[%s2 + $0x10] sm:$0xf]
        %v732 = vld [vmem:[%s2 + $0x14] sm:$0xf]
        %v733 = vld [vmem:[%s2 + $0x18] sm:$0xf]
        %v734 = vld [vmem:[%s2 + $0x1c] sm:$0xf]
        %v735 = vld [vmem:[%s3] sm:$0x1]
        %v737 = vlaneseq
        %v738 = vshrl.u32 %v737, 7
        %v739 = vsub.s32 0, %v738
        %v740 = vrot.slane %v735, %v739
        %v750 = vunpack.c.l.b16 %v727
        %v751 = vunpack.c.l.b16 %v728
        %v752 = vunpack.c.l.b16 %v729
        %v753 = vunpack.c.l.b16 %v730
        %v754 = vunpack.c.l.b16 %v731
        %v755 = vunpack.c.l.b16 %v732
        %v756 = vunpack.c.l.b16 %v733
        %v757 = vunpack.c.l.b16 %v734
        %v758 = vpack.c.b16 %v751, %v750
        %v759 = vpack.c.b16 %v753, %v752
        %v760 = vpack.c.b16 %v755, %v754
        %v761 = vpack.c.b16 %v757, %v756
        %vm766 = vcmask 523264
        %v768 = vsel %vm766, %v726, 0
        %770 = vmatprep.subr.bf16.mxu0 0
        %771 = vmatpush1.bf16.msra.mxu0 %v758
        %772 = vmatprep.subr.bf16.mxu0 0
        %773 = vmatpush1.bf16.msra.mxu0 %v759
        %774 = vmatprep.subr.bf16.mxu0 0
        %775 = vmatpush1.bf16.msra.mxu0 %v760
        %776 = vmatprep.subr.bf16.mxu0 0
        %777 = vmatpush1.bf16.msra.mxu0 %v761
        %778 = vmatprep.subr.bf16.mxu0 0
        %779 = vmatpush1.bf16.msra.mxu0 0
        %780 = vmatprep.subr.bf16.mxu0 0
        %781 = vmatpush1.bf16.msra.mxu0 0
        %782 = vmatprep.subr.bf16.mxu0 0
        %783 = vmatpush1.bf16.msra.mxu0 0
        %784 = vmatprep.subr.bf16.mxu0 0
        %785 = vmatpush1.bf16.msra.mxu0 0
        %786 = vmatprep.subr.bf16.mxu0 0
        %787 = vmatpush1.bf16.msra.mxu0 0
        %788 = vmatprep.subr.bf16.mxu0 0
        %789 = vmatpush1.bf16.msra.mxu0 0
        %790 = vmatprep.subr.bf16.mxu0 0
        %791 = vmatpush1.bf16.msra.mxu0 0
        %792 = vmatprep.subr.bf16.mxu0 0
        %793 = vmatpush1.bf16.msra.mxu0 0
        %794 = vmatprep.subr.bf16.mxu0 0
        %795 = vmatpush1.bf16.msra.mxu0 0
        %796 = vmatprep.subr.bf16.mxu0 0
        %797 = vmatpush1.bf16.msra.mxu0 0
        %798 = vmatprep.subr.bf16.mxu0 0
        %799 = vmatpush1.bf16.msra.mxu0 0
        %800 = vmatprep.subr.bf16.mxu0 0
        %801 = vmatpush1.bf16.msra.mxu0 0
        %802 = vmatprep.mubr.bf16.mxu0 0
        %803 = vmatmul.mubr.bf16.gmra.mrb[0].mxu0 %v768
        %v804 = vpop.f32.mrb[0].mxu0
        %v805 = vadd.f32 %v740, %v804
        %v806 = vpop.f32.mrb[0].mxu0
        %v807 = vpop.f32.mrb[0].mxu0
        %v808 = vpop.f32.mrb[0].mxu0
        %809 = vdwg.mxu0
        %810 = vst.msk [vmem:[%s188] sm:$0xff] %vm219, %v805
        %s811 = sand.u32 %s115, 1
        %s812 = scalar_lea.sflag [#allocation3], %s811
        %s813 = sand.u32 %s115, 1
        %s814 = smul.addr %s813, 8
        %s815 = scalar_lea.vmem [#allocation2], %s814
        // Predicated region
        $region37: #{tpu_custom_call.1} parent=35 // pred_check
          %p816 = pneg %p125
        $region38: #{tpu_custom_call.1} parent=35 // pred_check_branch
          %818 = sbr.rel (%p816) target = $region40
        $region39: #{tpu_custom_call.1} parent=35 // pred_region
          %s820 = ssub.s32 128, 128
          %821 = vsyncadd %s812, %s820
          %s822 = smul.addr %s18, 128
          %s823 = scalar_lea.hbm %s4, %s822
          %s825 = sshll.u32 %s815, 4
          %s826 = int_to_ptr.vmem [resolvable:$true] %s825
          %828 = dma.vmem_to_hbm [thread:$0]  %s826, 128, %s823, %s812
        $region40: #{tpu_custom_call.1} parent=35 // pred_fallthru
          _
      $region36: #{tpu_custom_call.1} parent=5 // pred_fallthru
        _
      %p829 = scmp.le.s32.totalorder 2, %s13
      // Predicated region
      $region41: #{tpu_custom_call.1} parent=5 // pred_check
        %p830 = pneg %p829
      $region42: #{tpu_custom_call.1} parent=5 // pred_check_branch
        %832 = sbr.rel (%p830) target = $region44
      $region43: #{tpu_custom_call.1} parent=5 // pred_region
        %s833 = ssub.s32 %s13, 2
        // Predicated region
        $region45: #{tpu_custom_call.1} parent=43 // pred_check
          %p834 = pneg %p131
        $region46: #{tpu_custom_call.1} parent=43 // pred_check_branch
          %836 = sbr.rel (%p834) target = $region48
        $region47: #{tpu_custom_call.1} parent=43 // pred_region
          %s837 = sand.u32 %s116, 1
          %s838 = scalar_lea.sflag [#allocation3], %s837
          %s839 = sand.u32 %s116, 1
          %s840 = smul.addr %s839, 8
          %s841 = scalar_lea.vmem [#allocation2], %s840
          %842 = dma.done %s838, 128
        $region48: #{tpu_custom_call.1} parent=43 // pred_fallthru
          _
      $region44: #{tpu_custom_call.1} parent=5 // pred_fallthru
        _
    $region6: #{tpu_custom_call.1} parent=1 // loop_footer
      %s17 = sadd.s32 1, %s13
    $region7: #{tpu_custom_call.1} parent=1 // loop_footer_branch
      %12 = sbr.rel target = $region3
    $region8: #{tpu_custom_call.1} parent=1 // loop_exit
      _
    %843 = vsyncpa [#allocation3], 1
    %s844 = scalar_lea.sflag [#allocation3], 1
    %845 = vsyncpa %s844, 1

</llo_original>
